<compile_context>
chip_gen: v5e
topology: v5e:2x2
jax: 0.10.0
libtpu: 0.0.40
codegen_flags: <defaults>
</compile_context>

<pallas_src>
import functools

import jax
import jax.numpy as jnp
from jax.experimental import pallas as pl
from jax.experimental.pallas import tpu as pltpu

GAMMA = 2.0
ALPHA = 0.25

# One logits tile <= ~2 MiB -> double-buffered inputs stay well under the
# scoped-VMEM default on v5e (16 MiB), v6e (32 MiB) and v7x (32 MiB of 64 MiB).
_MAX_TILE_BYTES = 2 * 1024 * 1024


def _round_up(x, m):
    return ((x + m - 1) // m) * m


def _pick_tile_n(n, c, itemsize):
    """Largest multiple-of-8 batch tile that keeps one logits tile under budget."""
    by_budget = (_MAX_TILE_BYTES // max(1, c * itemsize)) // 8 * 8
    tile_n = max(8, min(_round_up(n, 8), by_budget))
    return int(tile_n)


def _focal_loss_kernel(logits_ref, targets_ref, out_ref, *, gamma, alpha):
    logits = logits_ref[...].astype(jnp.float32)            # (tn, C)
    tgt = targets_ref[...]                                   # (tn, 1) int32

    # Stable log-softmax denominator.
    m = jnp.max(logits, axis=-1, keepdims=True)              # (tn, 1)
    lse = m + jnp.log(jnp.sum(jnp.exp(logits - m), axis=-1, keepdims=True))

    # Gather logit at the target class via lane-iota compare + masked sum.
    col = jax.lax.broadcasted_iota(jnp.int32, logits.shape, 1)
    tgt_logit = jnp.sum(jnp.where(col == tgt, logits, 0.0),
                        axis=-1, keepdims=True)               # (tn, 1)

    # Per-sample cross entropy; clamp at 0 so fp rounding can never make
    # pt > 1 (which would NaN a non-integer pow and is wrong anyway).
    ce = jnp.maximum(lse - tgt_logit, 0.0)                    # (tn, 1)
    pt = jnp.exp(-ce)
    om = 1.0 - pt

    # (1 - pt) ** gamma: multiply chain on the VPU for small integer gamma
    # (the EUP is already busy with the logsumexp exp stream).
    g = float(gamma)
    if g == int(g) and 0 <= int(g) <= 4:
        mod = jnp.ones_like(om)
        for _ in range(int(g)):
            mod = mod * om
    else:
        mod = om ** jnp.float32(g)

    focal = mod * ce

    # alpha is a Python float -> alpha_t = where(targets == 1, alpha, 1 - alpha)
    alpha_t = jnp.where(tgt == 1, jnp.float32(alpha), jnp.float32(1.0 - alpha))
    out_ref[...] = (alpha_t * focal).astype(out_ref.dtype)    # (tn, 1)


def focal_loss(logits, targets, *, gamma=GAMMA, alpha=ALPHA,
               reduction="mean", tile_n=None):
    """logits: (N, C) float32/bfloat16; targets: (N,) int class indices."""
    n, c = logits.shape
    itemsize = jnp.dtype(logits.dtype).itemsize
    if tile_n is None:
        tile_n = _pick_tile_n(n, c, itemsize)
    tile_n = max(8, (tile_n // 8) * 8)

    # Pad the batch up to a multiple of tile_n (padded rows are sliced off
    # before the reduction, so their values never matter).
    n_pad = pl.cdiv(n, tile_n) * tile_n
    targets_i32 = targets.astype(jnp.int32)
    if n_pad != n:
        logits = jnp.pad(logits, ((0, n_pad - n), (0, 0)))
        targets_i32 = jnp.pad(targets_i32, (0, n_pad - n))
    targets2d = targets_i32.reshape(n_pad, 1)

    kernel = functools.partial(_focal_loss_kernel, gamma=gamma, alpha=alpha)

    per_sample = pl.pallas_call(
        kernel,
        out_shape=jax.ShapeDtypeStruct((n_pad, 1), jnp.float32),
        grid_spec=pltpu.PrefetchScalarGridSpec(
            num_scalar_prefetch=0,
            grid=(n_pad // tile_n,),
            in_specs=[
                pl.BlockSpec((tile_n, c), lambda i: (i, 0)),   # logits tile
                pl.BlockSpec((tile_n, 1), lambda i: (i, 0)),   # targets tile
            ],
            out_specs=pl.BlockSpec((tile_n, 1), lambda i: (i, 0)),
        ),
        compiler_params=pltpu.CompilerParams(
            # Each grid step writes an independent output block -> fully
            # parallel (shards across both TensorCores on v7x).
            dimension_semantics=("parallel",),
        ),
    )(logits, targets2d)

    per_sample = per_sample[:n, 0]
    if reduction == "mean":
        return jnp.mean(per_sample)
    elif reduction == "sum":
        return jnp.sum(per_sample)
    else:
        return per_sample


def _reference_focal_loss(logits, targets, gamma=GAMMA, alpha=ALPHA):
    logits = logits.astype(jnp.float32)
    log_probs = jax.nn.log_softmax(logits, axis=-1)
    ce = -jnp.take_along_axis(log_probs, targets[:, None].astype(jnp.int32),
                              axis=-1)[:, 0]
    pt = jnp.exp(-ce)
    focal = (1.0 - pt) ** gamma * ce
    alpha_t = jnp.where(targets == 1, alpha, 1.0 - alpha)
    return jnp.mean(alpha_t * focal)


if __name__ == "__main__":
    key = jax.random.PRNGKey(0)
    k1, k2, k3, k4 = jax.random.split(key, 4)

    # Small synthetic shapes: 16 samples, 128 classes.
    N, C = 16, 128
    logits = jax.random.normal(k1, (N, C), dtype=jnp.float32)
    targets = jax.random.randint(k2, (N,), 0, C, dtype=jnp.int32)

    out = jax.block_until_ready(focal_loss(logits, targets))
    ref = _reference_focal_loss(logits, targets)
    assert jnp.allclose(out, ref, rtol=1e-5, atol=1e-5), (out, ref)

    # Exercise the batch-padding path (N not a multiple of the tile).
    N2 = 20
    logits2 = jax.random.normal(k3, (N2, C), dtype=jnp.float32)
    targets2 = jax.random.randint(k4, (N2,), 0, C, dtype=jnp.int32)
    out2 = jax.block_until_ready(focal_loss(logits2, targets2))
    ref2 = _reference_focal_loss(logits2, targets2)
    assert jnp.allclose(out2, ref2, rtol=1e-5, atol=1e-5), (out2, ref2)

    print("KERNEL_OK")
</pallas_src>

<mosaic_0001>
module attributes {stable_mosaic.version = 11 : i64} {
  func.func @_focal_loss_kernel(%arg0: i32, %arg1: memref<16x128xf32, #tpu.memory_space<vmem>>, %arg2: memref<16x1xi32, #tpu.memory_space<vmem>>, %arg3: memref<16x1xf32, #tpu.memory_space<vmem>>) attributes {dimension_semantics = [#tpu.dimension_semantics<parallel>], iteration_bounds = array<i64: 1>, scalar_prefetch = 0 : i64, scratch_operands = 0 : i64, tpu.core_type = #tpu.core_type<tc>, window_params = [{transform_indices = @transform_0, window_bounds = array<i64: 16, 128>}, {transform_indices = @transform_1, window_bounds = array<i64: 16, 1>}, {transform_indices = @transform_2, window_bounds = array<i64: 16, 1>}]} {
    %c0 = arith.constant 0 : index
    %c0_0 = arith.constant 0 : index
    %0 = vector.load %arg1[%c0, %c0_0] : memref<16x128xf32, #tpu.memory_space<vmem>>, vector<16x128xf32>
    %c0_1 = arith.constant 0 : index
    %c0_2 = arith.constant 0 : index
    %1 = vector.load %arg2[%c0_1, %c0_2] : memref<16x1xi32, #tpu.memory_space<vmem>>, vector<16x1xi32>
    %cst = arith.constant dense<0xFF800000> : vector<16xf32>
    %2 = vector.multi_reduction <maximumf>, %0, %cst [1] : vector<16x128xf32> to vector<16xf32>
    %3 = vector.shape_cast %2 : vector<16xf32> to vector<16x1xf32>
    %4 = vector.broadcast %3 : vector<16x1xf32> to vector<16x128xf32>
    %5 = arith.subf %0, %4 : vector<16x128xf32>
    %6 = math.exp %5 : vector<16x128xf32>
    %cst_3 = arith.constant dense<0.000000e+00> : vector<16xf32>
    %7 = vector.multi_reduction <add>, %6, %cst_3 [1] : vector<16x128xf32> to vector<16xf32>
    %8 = vector.shape_cast %7 : vector<16xf32> to vector<16x1xf32>
    %9 = math.log %8 : vector<16x1xf32>
    %10 = arith.addf %3, %9 : vector<16x1xf32>
    %11 = tpu.iota {dimensions = array<i32: 1>} : vector<16x128xi32>
    %12 = vector.broadcast %1 : vector<16x1xi32> to vector<16x128xi32>
    %13 = arith.cmpi eq, %11, %12 : vector<16x128xi32>
    %cst_4 = arith.constant 0.000000e+00 : f32
    %14 = vector.broadcast %cst_4 : f32 to vector<16x128xf32>
    %15 = arith.select %13, %0, %14 : vector<16x128xi1>, vector<16x128xf32>
    %cst_5 = arith.constant dense<0.000000e+00> : vector<16xf32>
    %16 = vector.multi_reduction <add>, %15, %cst_5 [1] : vector<16x128xf32> to vector<16xf32>
    %17 = vector.shape_cast %16 : vector<16xf32> to vector<16x1xf32>
    %18 = arith.subf %10, %17 : vector<16x1xf32>
    %cst_6 = arith.constant 0.000000e+00 : f32
    %19 = vector.broadcast %cst_6 : f32 to vector<16x1xf32>
    %20 = arith.maximumf %18, %19 : vector<16x1xf32>
    %cst_7 = arith.constant 0.000000e+00 : f32
    %21 = vector.broadcast %cst_7 : f32 to vector<16x1xf32>
    %22 = arith.subf %21, %20 : vector<16x1xf32>
    %23 = math.exp %22 : vector<16x1xf32>
    %cst_8 = arith.constant 1.000000e+00 : f32
    %24 = vector.broadcast %cst_8 : f32 to vector<16x1xf32>
    %25 = arith.subf %24, %23 : vector<16x1xf32>
    %cst_9 = arith.constant 1.000000e+00 : f32
    %26 = vector.broadcast %cst_9 : f32 to vector<16x1xf32>
    %27 = arith.mulf %26, %25 : vector<16x1xf32>
    %28 = arith.mulf %27, %25 : vector<16x1xf32>
    %29 = arith.mulf %28, %20 : vector<16x1xf32>
    %c1_i32 = arith.constant 1 : i32
    %30 = vector.broadcast %c1_i32 : i32 to vector<16x1xi32>
    %31 = arith.cmpi eq, %1, %30 : vector<16x1xi32>
    %cst_10 = arith.constant 2.500000e-01 : f32
    %cst_11 = arith.constant 7.500000e-01 : f32
    %32 = vector.broadcast %cst_10 : f32 to vector<16x1xf32>
    %33 = vector.broadcast %cst_11 : f32 to vector<16x1xf32>
    %34 = arith.select %31, %32, %33 : vector<16x1xi1>, vector<16x1xf32>
    %35 = arith.mulf %34, %29 : vector<16x1xf32>
    %c0_12 = arith.constant 0 : index
    %c0_13 = arith.constant 0 : index
    %36 = vector.load %arg3[%c0_12, %c0_13] : memref<16x1xf32, #tpu.memory_space<vmem>>, vector<16x1xf32>
    tpu.vector_store %arg3[%c0_12, %c0_13], %35 {strides = array<i32>} : memref<16x1xf32, #tpu.memory_space<vmem>>, vector<16x1xf32>,
    return
  }
  func.func @transform_0(%arg0: i32) -> (i32, i32) {
    %c0_i32 = arith.constant 0 : i32
    %c0_i32_0 = arith.constant 0 : i32
    return %arg0, %c0_i32 : i32, i32
  }
  func.func @transform_1(%arg0: i32) -> (i32, i32) {
    %c0_i32 = arith.constant 0 : i32
    %c0_i32_0 = arith.constant 0 : i32
    return %arg0, %c0_i32 : i32, i32
  }
  func.func @transform_2(%arg0: i32) -> (i32, i32) {
    %c0_i32 = arith.constant 0 : i32
    %c0_i32_0 = arith.constant 0 : i32
    return %arg0, %c0_i32 : i32, i32
  }
}

</mosaic_0001>

<llo_original>
// kernel: tpu_custom_call.1
$region0: #{tpu_custom_call.1}
  #allocation0 [shape = 'u32[]', space=smem, size = 0x4, offset = 0x4, fixed_abs, tag = 'smem constant byte address 0x4 - core index']
  #allocation1 [shape = 'u32[72,128]{1,0:T(1,128)}', space=vmem, size = 0x9000, scoped, tag = 'internal scratch']
  %s0 = inlined_call_operand.vmem [shape: f32[16,128], index: 0, kind: input, shape index: {}]
  %s1 = inlined_call_operand.vmem [shape: s32[16,1], index: 1, kind: input, shape index: {}]
  %s2 = inlined_call_operand.vmem [shape: f32[16,1], index: 2, kind: output, shape index: {}]
  %s3 = sld [smem:[#allocation0]]
  $region18: #{tpu_custom_call.1} parent=0
    _
  %s5 = ssub.s32 1, %s3
  %s6 = scalar_select 0, %s5, %s3
  // Predicated region
  $region2: #{tpu_custom_call.1} parent=0 // pred_check
    _
  $region3: #{tpu_custom_call.1} parent=0 // pred_check_branch
    %8 = sbr.rel (0) target = $region5
  $region4: #{tpu_custom_call.1} parent=0 // pred_region
    _
  $region5: #{tpu_custom_call.1} parent=0 // pred_fallthru
    _
  // Predicated region
  $region6: #{tpu_custom_call.1} parent=0 // pred_check
    _
  $region7: #{tpu_custom_call.1} parent=0 // pred_check_branch
    %10 = sbr.rel (0) target = $region9
  $region8: #{tpu_custom_call.1} parent=0 // pred_region
    _
  $region9: #{tpu_custom_call.1} parent=0 // pred_fallthru
    _
  %v11 = vld [vmem:[%s0] sm:$0xff]
  %v12 = vld [vmem:[%s0 + $0x8] sm:$0xff]
  %v13 = vld [vmem:[%s1] sm:$0xff]
  %v14 = vld [vmem:[%s1 + $0x8] sm:$0xff]
  %15 = vmax.xlane.f32.xlu0 %v11
  %v16 = vpop.xlane.xlu0 %15
  %17 = vmax.xlane.f32.xlu0 %v12
  %v18 = vpop.xlane.xlu0 %17
  %v19 = vsub.f32 %v11, %v16
  %v20 = vsub.f32 %v12, %v18
  %v21 = vmul.f32 %v19, 1.442695
  %v22 = vpow.pop %v21
  %v23 = vmul.f32 %v20, 1.442695
  %v24 = vpow.pop %v23
  %25 = vadd.xlane.f32.xlu0 %v22
  %v26 = vpop.xlane.xlu0 %25
  %27 = vadd.xlane.f32.xlu0 %v24
  %v28 = vpop.xlane.xlu0 %27
  %v29 = vlog2.pop %v26
  %v30 = vmul.f32 %v29, 0.6931472
  %v31 = vlog2.pop %v28
  %v32 = vmul.f32 %v31, 0.6931472
  %v33 = vadd.f32 %v16, %v30
  %v34 = vadd.f32 %v18, %v32
  %v35 = vlaneseq
  %v36 = vand.u32 %v35, 127
  %37 = vset.pattern.permute.xlu0 0
  %38 = vperm.xlu0 %37, %v13
  %v39 = vpop.permute.xlu0 %38
  %40 = vset.pattern.permute.xlu0 0
  %41 = vperm.xlu0 %40, %v14
  %v42 = vpop.permute.xlu0 %41
  %vm43 = vcmp.eq.s32.totalorder %v36, %v39
  %vm44 = vcmp.eq.s32.totalorder %v36, %v42
  %v45 = vsel %vm43, %v11, 0.0
  %v46 = vsel %vm44, %v12, 0.0
  %47 = vadd.xlane.f32.xlu0 %v45
  %v48 = vpop.xlane.xlu0 %47
  %49 = vadd.xlane.f32.xlu0 %v46
  %v50 = vpop.xlane.xlu0 %49
  %v51 = vsub.f32 %v33, %v48
  %v52 = vsub.f32 %v34, %v50
  %v53 = vmax.f32 %v51, 0.0
  %v54 = vmax.f32 %v52, 0.0
  %v55 = vsub.f32 0.0, %v53
  %v56 = vsub.f32 0.0, %v54
  %v57 = vmul.f32 %v55, 1.442695
  %v58 = vpow.pop %v57
  %v59 = vmul.f32 %v56, 1.442695
  %v60 = vpow.pop %v59
  %v61 = vsub.f32 1.0, %v58
  %v62 = vsub.f32 1.0, %v60
  %v63 = vmul.f32 %v61, %v61
  %v64 = vmul.f32 %v62, %v62
  %v65 = vmul.f32 %v63, %v53
  %v66 = vmul.f32 %v64, %v54
  %vm67 = vcmp.eq.s32.totalorder %v13, 1
  %vm68 = vcmp.eq.s32.totalorder %v14, 1
  %v69 = vsel %vm67, 0.25, 0.75
  %v70 = vsel %vm68, 0.25, 0.75
  %v71 = vmul.f32 %v69, %v65
  %v72 = vmul.f32 %v70, %v66
  %vm73 = vcmask 7168
  %74 = vst.msk [vmem:[%s2] sm:$0xff] %vm73, %v71
  %75 = vst.msk [vmem:[%s2 + $0x8] sm:$0xff] %vm73, %v72
  // Predicated region
  $region10: #{tpu_custom_call.1} parent=0 // pred_check
    _
  $region11: #{tpu_custom_call.1} parent=0 // pred_check_branch
    %77 = sbr.rel (0) target = $region13
  $region12: #{tpu_custom_call.1} parent=0 // pred_region
    _
  $region13: #{tpu_custom_call.1} parent=0 // pred_fallthru
    _
  // Predicated region
  $region14: #{tpu_custom_call.1} parent=0 // pred_check
    _
  $region15: #{tpu_custom_call.1} parent=0 // pred_check_branch
    %79 = sbr.rel (0) target = $region17
  $region16: #{tpu_custom_call.1} parent=0 // pred_region
    _
  $region17: #{tpu_custom_call.1} parent=0 // pred_fallthru
    _

</llo_original>
